<compile_context>
chip_gen: v5e
topology: v5e:2x2
jax: 0.10.0
libtpu: 0.0.40
codegen_flags: <defaults>
</compile_context>

<pallas_src>
import jax
import jax.numpy as jnp
from jax.experimental import pallas as pl
from jax.experimental.pallas import tpu as pltpu


def _round_up(x, m):
    return ((x + m - 1) // m) * m


def _plan_dim(size, target, granularity):
    """Pad `size` to `granularity`; pick the largest tile <= target that is a
    multiple of `granularity` and divides the padded size."""
    padded = _round_up(size, granularity)
    if padded <= target:
        return padded, padded
    tile = (target // granularity) * granularity
    while tile >= granularity:
        if padded % tile == 0:
            return padded, tile
        tile -= granularity
    return padded, granularity  # unreachable: granularity always divides


def _linear_kernel(x_ref, wt_ref, b_ref, o_ref):
    # x_ref: (tm, tk)  wt_ref: (tk, tn)  b_ref: (1, tn)  o_ref: (tm, tn) f32
    k = pl.program_id(2)

    @pl.when(k == 0)
    def _():
        # Initialize the resident output block with the broadcast bias.
        o_ref[...] = jnp.broadcast_to(b_ref[...], o_ref.shape).astype(o_ref.dtype)

    o_ref[...] += jnp.dot(x_ref[...], wt_ref[...],
                          preferred_element_type=jnp.float32)


def multinomial_logistic_regression(x, weight, bias, *,
                                    tm_target=1024, tn_target=512,
                                    tk_target=1024):
    """Forward pass of nn.Linear: x @ weight.T + bias.

    x:      (B, input_dim)
    weight: (output_dim, input_dim)   (PyTorch convention, NOT transposed)
    bias:   (output_dim,)
    """
    B, d_in = x.shape
    d_out, d_in_w = weight.shape
    assert d_in == d_in_w, "weight inner dim must match x inner dim"

    # --- Tile / padding plan ------------------------------------------------
    # M (batch): multiple of 8 sublanes; only coarsen to 128 when tiling needed.
    B_p = _round_up(B, 8)
    if B_p <= tm_target:
        tm = B_p
    else:
        B_p, tm = _plan_dim(B, tm_target, 128)

    # N (d_out): lane-dense; 256 granularity for the 256-wide MXUs on v6e/v7x.
    if d_out <= 128:
        d_out_p, tn = 128, 128
    else:
        d_out_p, tn = _plan_dim(d_out, tn_target, 256)

    # K (d_in): no padding at all when it fits in one tile (block == full dim),
    # otherwise 128-granular padding with the largest dividing tile.
    if d_in <= tk_target:
        d_in_p, tk = d_in, d_in
    else:
        d_in_p, tk = _plan_dim(d_in, tk_target, 128)

    # v7x megacore: make sure at least one "parallel" axis has >= 2 steps when
    # the shapes allow it, so both TensorCores get work.
    if (B_p // tm) == 1 and (d_out_p // tn) == 1:
        if tn >= 512:
            tn //= 2
        elif tm >= 16 and tm % 16 == 0:
            tm //= 2

    # --- Pad operands (padding contributes 0; sliced off below) --------------
    x_p = x if (B_p == B and d_in_p == d_in) else jnp.pad(
        x, ((0, B_p - B), (0, d_in_p - d_in)))
    # One-time transpose to (d_in_p, d_out_p): kernel tiles are (tk, tn),
    # lane-dense in N, contraction is plain NN layout for the MXU.
    w_t = jnp.pad(weight, ((0, d_out_p - d_out), (0, d_in_p - d_in))).T
    b_p = (bias if d_out_p == d_out else jnp.pad(bias, (0, d_out_p - d_out)))
    b_p = b_p.reshape(1, d_out_p).astype(jnp.float32)

    grid = (B_p // tm, d_out_p // tn, d_in_p // tk)
    g_m, g_n, _ = grid

    # Double-buffered VMEM footprint (f32): x, W tiles x2, bias x2, out buffers.
    footprint = 4 * (2 * tm * tk + 2 * tk * tn + 2 * tn + 2 * tm * tn)
    vmem_limit = min(60 * 1024 * 1024,
                     max(32 * 1024 * 1024, int(footprint * 1.5)))

    out_p = pl.pallas_call(
        _linear_kernel,
        out_shape=jax.ShapeDtypeStruct((B_p, d_out_p), jnp.float32),
        grid_spec=pltpu.PrefetchScalarGridSpec(
            num_scalar_prefetch=0,
            grid=grid,
            in_specs=[
                pl.BlockSpec((tm, tk), lambda i, j, k: (i, k)),   # x tile
                pl.BlockSpec((tk, tn), lambda i, j, k: (k, j)),   # W.T tile
                pl.BlockSpec((1, tn), lambda i, j, k: (0, j)),    # bias tile
            ],
            out_specs=pl.BlockSpec((tm, tn), lambda i, j, k: (i, j)),
        ),
        compiler_params=pltpu.CompilerParams(
            dimension_semantics=("parallel", "parallel", "arbitrary"),
            vmem_limit_bytes=vmem_limit),
        cost_estimate=pl.CostEstimate(
            flops=2 * B_p * d_in_p * d_out_p,
            # x is re-read once per N tile, W once per M tile.
            bytes_accessed=4 * (B_p * d_in_p * g_n
                                + d_in_p * d_out_p * g_m
                                + B_p * d_out_p
                                + d_out_p * g_m),
            transcendentals=0),
    )(x_p, w_t, b_p)

    return out_p[:B, :d_out].astype(x.dtype)


if __name__ == "__main__":
    # Small shapes consistent with the module: input_dim=32, output_dim=16, batch=8.
    B, input_dim, output_dim = 8, 32, 16

    key = jax.random.PRNGKey(0)
    kx, kw, kb = jax.random.split(key, 3)

    # Deterministic init mimicking torch.nn.Linear: U(-1/sqrt(in), 1/sqrt(in)).
    bound = 1.0 / (input_dim ** 0.5)
    weight = jax.random.uniform(kw, (output_dim, input_dim), jnp.float32,
                                minval=-bound, maxval=bound)
    bias = jax.random.uniform(kb, (output_dim,), jnp.float32,
                              minval=-bound, maxval=bound)
    x = jax.random.normal(kx, (B, input_dim), jnp.float32)

    out = multinomial_logistic_regression(x, weight, bias)
    out = jax.block_until_ready(out)

    # Reference check in plain JAX.
    ref = x @ weight.T + bias
    assert out.shape == (B, output_dim)
    assert jnp.allclose(out, ref, atol=1e-5, rtol=1e-5)

    print("KERNEL_OK")
</pallas_src>

<mosaic_0001>
module attributes {stable_mosaic.version = 11 : i64} {
  func.func @_linear_kernel(%arg0: i32, %arg1: i32, %arg2: i32, %arg3: memref<8x32xf32, #tpu.memory_space<vmem>>, %arg4: memref<32x128xf32, #tpu.memory_space<vmem>>, %arg5: memref<1x128xf32, #tpu.memory_space<vmem>>, %arg6: memref<8x128xf32, #tpu.memory_space<vmem>>) attributes {dimension_semantics = [#tpu.dimension_semantics<parallel>, #tpu.dimension_semantics<parallel>, #tpu.dimension_semantics<arbitrary>], iteration_bounds = array<i64: 1, 1, 1>, scalar_prefetch = 0 : i64, scratch_operands = 0 : i64, tpu.core_type = #tpu.core_type<tc>, window_params = [{transform_indices = @transform_0, window_bounds = array<i64: 8, 32>}, {transform_indices = @transform_1, window_bounds = array<i64: 32, 128>}, {transform_indices = @transform_2, window_bounds = array<i64: 1, 128>}, {transform_indices = @transform_3, window_bounds = array<i64: 8, 128>}]} {
    %c0_i32 = arith.constant 0 : i32
    %0 = arith.cmpi eq, %arg2, %c0_i32 : i32
    %1 = arith.extui %0 : i1 to i32
    %c0_i32_0 = arith.constant 0 : i32
    %2 = arith.cmpi ne, %1, %c0_i32_0 : i32
    scf.if %2 {
      %c0_8 = arith.constant 0 : index
      %c0_9 = arith.constant 0 : index
      %9 = vector.load %arg5[%c0_8, %c0_9] : memref<1x128xf32, #tpu.memory_space<vmem>>, vector<1x128xf32>
      %10 = vector.shape_cast %9 : vector<1x128xf32> to vector<1x128xf32>
      %11 = vector.broadcast %10 : vector<1x128xf32> to vector<8x128xf32>
      %c0_10 = arith.constant 0 : index
      %c0_11 = arith.constant 0 : index
      %12 = vector.load %arg6[%c0_10, %c0_11] : memref<8x128xf32, #tpu.memory_space<vmem>>, vector<8x128xf32>
      tpu.vector_store %arg6[%c0_10, %c0_11], %11 {strides = array<i32>} : memref<8x128xf32, #tpu.memory_space<vmem>>, vector<8x128xf32>,
    } else {
    }
    %c0 = arith.constant 0 : index
    %c0_1 = arith.constant 0 : index
    %3 = vector.load %arg6[%c0, %c0_1] : memref<8x128xf32, #tpu.memory_space<vmem>>, vector<8x128xf32>
    %c0_2 = arith.constant 0 : index
    %c0_3 = arith.constant 0 : index
    %4 = vector.load %arg3[%c0_2, %c0_3] : memref<8x32xf32, #tpu.memory_space<vmem>>, vector<8x32xf32>
    %c0_4 = arith.constant 0 : index
    %c0_5 = arith.constant 0 : index
    %5 = vector.load %arg4[%c0_4, %c0_5] : memref<32x128xf32, #tpu.memory_space<vmem>>, vector<32x128xf32>
    %cst = arith.constant dense<0.000000e+00> : vector<8x128xf32>
    %6 = tpu.matmul %4, %5, %cst {dimension_numbers = #tpu.dot_dimension_numbers<[1], [0], [0], [1], [0, 0, 1, 1], [], []>} : vector<8x32xf32>, vector<32x128xf32>, vector<8x128xf32> -> vector<8x128xf32>
    %7 = arith.addf %3, %6 : vector<8x128xf32>
    %c0_6 = arith.constant 0 : index
    %c0_7 = arith.constant 0 : index
    %8 = vector.load %arg6[%c0_6, %c0_7] : memref<8x128xf32, #tpu.memory_space<vmem>>, vector<8x128xf32>
    tpu.vector_store %arg6[%c0_6, %c0_7], %7 {strides = array<i32>} : memref<8x128xf32, #tpu.memory_space<vmem>>, vector<8x128xf32>,
    return
  }
  func.func @transform_0(%arg0: i32, %arg1: i32, %arg2: i32) -> (i32, i32) {
    %c0_i32 = arith.constant 0 : i32
    return %arg0, %arg2 : i32, i32
  }
  func.func @transform_1(%arg0: i32, %arg1: i32, %arg2: i32) -> (i32, i32) {
    %c0_i32 = arith.constant 0 : i32
    return %arg2, %arg1 : i32, i32
  }
  func.func @transform_2(%arg0: i32, %arg1: i32, %arg2: i32) -> (i32, i32) {
    %c0_i32 = arith.constant 0 : i32
    %c0_i32_0 = arith.constant 0 : i32
    return %c0_i32, %arg1 : i32, i32
  }
  func.func @transform_3(%arg0: i32, %arg1: i32, %arg2: i32) -> (i32, i32) {
    %c0_i32 = arith.constant 0 : i32
    return %arg0, %arg1 : i32, i32
  }
}

</mosaic_0001>

<llo_original>
// kernel: tpu_custom_call.1
$region0: #{tpu_custom_call.1}
  #allocation0 [shape = 'u32[]', space=smem, size = 0x4, offset = 0x4, fixed_abs, tag = 'smem constant byte address 0x4 - core index']
  #allocation1 [shape = 'u32[72,128]{1,0:T(1,128)}', space=vmem, size = 0x9000, scoped, tag = 'internal scratch']
  %s0 = inlined_call_operand.hbm [shape: f32[8,32], index: 0, kind: input, shape index: {}]
  %s1 = inlined_call_operand.hbm [shape: f32[32,128], index: 1, kind: input, shape index: {}]
  %s2 = inlined_call_operand.vmem [shape: f32[1,128], index: 2, kind: input, shape index: {}]
  %s3 = inlined_call_operand.hbm [shape: f32[8,128], index: 3, kind: output, shape index: {}]
  %s4 = sld [smem:[#allocation0]]
  $region34: #{tpu_custom_call.1} parent=0
    _
  %s6 = ssub.s32 1, %s4
  %s7 = scalar_select 0, %s6, %s4
  $region1: #{tpu_custom_call.1} parent=0
    #allocation2 [shape = 'u8[4096]{0}', space=vmem, size = 0x1000, scoped, tag = 'input window, operand 0, single buffered']
    #allocation3 [shape = 's32[1]{0}', space=sflag, size = 0x4, scoped, tag = 'scoped memory for tpu_custom_call.1']
    #allocation4 [shape = 's32[1]{0}', space=sflag, size = 0x4, scoped, tag = 'scoped memory for tpu_custom_call.1']
    #allocation5 [shape = 'u8[16384]{0}', space=vmem, size = 0x4000, scoped, tag = 'input window, operand 1, single buffered']
    #allocation6 [shape = 's32[1]{0}', space=sflag, size = 0x4, scoped, tag = 'scoped memory for tpu_custom_call.1']
    #allocation7 [shape = 'u8[4096]{0}', space=vmem, size = 0x1000, scoped, tag = 'output window, operand 0, single buffered']
    %8 = vsyncpa [#allocation3], 0
    %9 = vsyncpa [#allocation6], 0
    %10 = vsyncpa [#allocation4], 0
    // Predicated region
    $region2: #{tpu_custom_call.1} parent=1 // pred_check
      _
    $region3: #{tpu_custom_call.1} parent=1 // pred_check_branch
      %12 = sbr.rel (0) target = $region5
    $region4: #{tpu_custom_call.1} parent=1 // pred_region
      %14 = vsyncadd [#allocation3], 0
      %s16 = sshll.u32 %s0, 4
      %s17 = int_to_ptr.hbm [resolvable:$true] %s16
      %s18 = sshll.u32 [#allocation2], 4
      %s19 = int_to_ptr.vmem [resolvable:$true] %s18
      %21 = dma.hbm_to_vmem [thread:$0]  %s17, 128, %s19, [#allocation3]
    $region5: #{tpu_custom_call.1} parent=1 // pred_fallthru
      _
    // Predicated region
    $region6: #{tpu_custom_call.1} parent=1 // pred_check
      _
    $region7: #{tpu_custom_call.1} parent=1 // pred_check_branch
      %23 = sbr.rel (0) target = $region9
    $region8: #{tpu_custom_call.1} parent=1 // pred_region
      %25 = vsyncadd [#allocation6], 0
      %s26 = sshll.u32 %s1, 4
      %s27 = int_to_ptr.hbm [resolvable:$true] %s26
      %s28 = sshll.u32 [#allocation5], 4
      %s29 = int_to_ptr.vmem [resolvable:$true] %s28
      %34 = dma.hbm_to_vmem [thread:$0]  %s27, 512, %s29, [#allocation6], 128, 128, 8
    $region9: #{tpu_custom_call.1} parent=1 // pred_fallthru
      _
    // Predicated region
    $region10: #{tpu_custom_call.1} parent=1 // pred_check
      _
    $region11: #{tpu_custom_call.1} parent=1 // pred_check_branch
      %36 = sbr.rel (0) target = $region13
    $region12: #{tpu_custom_call.1} parent=1 // pred_region
      _
    $region13: #{tpu_custom_call.1} parent=1 // pred_fallthru
      _
    // Predicated region
    $region14: #{tpu_custom_call.1} parent=1 // pred_check
      _
    $region15: #{tpu_custom_call.1} parent=1 // pred_check_branch
      %38 = sbr.rel (0) target = $region17
    $region16: #{tpu_custom_call.1} parent=1 // pred_region
      %40 = dma.done [#allocation3], 128
    $region17: #{tpu_custom_call.1} parent=1 // pred_fallthru
      _
    // Predicated region
    $region18: #{tpu_custom_call.1} parent=1 // pred_check
      _
    $region19: #{tpu_custom_call.1} parent=1 // pred_check_branch
      %42 = sbr.rel (0) target = $region21
    $region20: #{tpu_custom_call.1} parent=1 // pred_region
      %44 = dma.done [#allocation6], 512
    $region21: #{tpu_custom_call.1} parent=1 // pred_fallthru
      _
    %p45 = scmp.eq.s32.totalorder 0, 0
    // Predicated region
    $region22: #{tpu_custom_call.1} parent=1 // pred_check
      %p46 = pneg %p45
    $region23: #{tpu_custom_call.1} parent=1 // pred_check_branch
      %48 = sbr.rel (%p46) target = $region25
    $region24: #{tpu_custom_call.1} parent=1 // pred_region
      %v49 = vld [vmem:[%s2] sm:$0x1]
      %v51 = vperm.slane %v49, 0
      %53 = vst [vmem:[#allocation7] sm:$0xff] %v51
    $region25: #{tpu_custom_call.1} parent=1 // pred_fallthru
      _
    %v54 = vld [vmem:[#allocation7] sm:$0xff]
    %v55 = vld [vmem:[#allocation2] sm:$0xff]
    %v56 = vld [vmem:[#allocation5] sm:$0xff]
    %v57 = vld [vmem:[#allocation5 + $0x8] sm:$0xff]
    %v58 = vld [vmem:[#allocation5 + $0x10] sm:$0xff]
    %v59 = vld [vmem:[#allocation5 + $0x18] sm:$0xff]
    %vm60 = vcmask 261120
    %v62 = vsel %vm60, %v55, 0
    %64 = vmatpush.msra.mxu0 0.0
    %65 = vmatpush.msra.mxu0 0.0
    %66 = vmatpush.msra.mxu0 0.0
    %67 = vmatpush.msra.mxu0 0.0
    %68 = vmatpush.msra.mxu0 0.0
    %69 = vmatpush.msra.mxu0 0.0
    %70 = vmatpush.msra.mxu0 0.0
    %71 = vmatpush.msra.mxu0 0.0
    %72 = vmatpush.msra.mxu0 0.0
    %73 = vmatpush.msra.mxu0 0.0
    %74 = vmatpush.msra.mxu0 0.0
    %75 = vmatpush.msra.mxu0 0.0
    %76 = vmatpush.msra.mxu0 %v59
    %77 = vmatpush.msra.mxu0 %v58
    %78 = vmatpush.msra.mxu0 %v57
    %79 = vmatpush.msra.mxu0 %v56
    %80 = vmatmul.f32.gmra.mxu0 %v62
    %v81 = vpop.f32.mrf.mxu0
    %v82 = vadd.f32 0.0, %v81
    %83 = vdwg.mxu0
    %v84 = vadd.f32 %v54, %v82
    %85 = vst [vmem:[#allocation7] sm:$0xff] %v84
    // Predicated region
    $region26: #{tpu_custom_call.1} parent=1 // pred_check
      _
    $region27: #{tpu_custom_call.1} parent=1 // pred_check_branch
      %87 = sbr.rel (0) target = $region29
    $region28: #{tpu_custom_call.1} parent=1 // pred_region
      %89 = vsyncadd [#allocation4], 0
      %s91 = sshll.u32 [#allocation7], 4
      %s92 = int_to_ptr.vmem [resolvable:$true] %s91
      %s93 = sshll.u32 %s3, 4
      %s94 = int_to_ptr.hbm [resolvable:$true] %s93
      %96 = dma.vmem_to_hbm [thread:$0]  %s92, 128, %s94, [#allocation4]
    $region29: #{tpu_custom_call.1} parent=1 // pred_fallthru
      _
    // Predicated region
    $region30: #{tpu_custom_call.1} parent=1 // pred_check
      _
    $region31: #{tpu_custom_call.1} parent=1 // pred_check_branch
      %98 = sbr.rel (0) target = $region33
    $region32: #{tpu_custom_call.1} parent=1 // pred_region
      %100 = dma.done [#allocation4], 128
    $region33: #{tpu_custom_call.1} parent=1 // pred_fallthru
      _
    %101 = vsyncpa [#allocation3], 1
    %102 = vsyncpa [#allocation6], 1
    %103 = vsyncpa [#allocation4], 1

</llo_original>
